<compile_context>
chip_gen: v7x
topology: tpu7x:2x2x1
jax: 0.10.0
libtpu: 0.0.40
codegen_flags: <defaults>
</compile_context>

<pallas_src>
from functools import partial

import numpy as np
import jax
import jax.numpy as jnp
from jax.experimental import pallas as pl
from jax.experimental.pallas import tpu as pltpu

SUB = 8      # node-dimension padding (f32 sublane minimum)
LANE = 128   # lane-dense padding for every feature / hidden / action dimension


# ----------------------------- Pallas kernel ------------------------------ #
def thermogrl_kernel(feat_ref, a_hat_ref, slabs_ref, biases_ref, q_ref):
    # feat_ref  : (SUB, LANE)        f32
    # a_hat_ref : (SUB, SUB)         f32
    # slabs_ref : (4, LANE, LANE)    compute dtype = [W_enc, W_gcn, W_q1, W_q2]
    # biases_ref: (4, LANE)          f32          = [b_enc, b_gcn, b_q1, b_q2]
    wdt = slabs_ref.dtype
    b = biases_ref[...]                               # (4, LANE), tiny

    # Encoder: h1 = relu(feature @ W_enc + b_enc)
    feat = feat_ref[...].astype(wdt)
    h1 = jnp.maximum(
        jnp.dot(feat, slabs_ref[0], preferred_element_type=jnp.float32)
        + b[0:1, :], 0.0)

    # GCNConv: h2 = relu(A_hat @ (h1 @ W_gcn) + b_gcn)
    xw = jnp.dot(h1.astype(wdt), slabs_ref[1], preferred_element_type=jnp.float32)
    h2 = jnp.maximum(
        jnp.dot(a_hat_ref[...], xw, preferred_element_type=jnp.float32)
        + b[1:2, :], 0.0)

    # Q_Net: q = relu(h2 @ W_q1 + b_q1) @ W_q2 + b_q2
    h3 = jnp.maximum(
        jnp.dot(h2.astype(wdt), slabs_ref[2], preferred_element_type=jnp.float32)
        + b[2:3, :], 0.0)
    q_ref[...] = (
        jnp.dot(h3.astype(wdt), slabs_ref[3], preferred_element_type=jnp.float32)
        + b[3:4, :])


# ------------------------- packing / wrapper code -------------------------- #
def _pad_weight(w):
    w = jnp.asarray(w, jnp.float32)
    out = jnp.zeros((LANE, LANE), jnp.float32)
    return out.at[: w.shape[0], : w.shape[1]].set(w)


def _pad_bias(b):
    b = jnp.asarray(b, jnp.float32).reshape(-1)
    return jnp.zeros((LANE,), jnp.float32).at[: b.shape[0]].set(b)


def pack_model(a_hat, params, compute_dtype=jnp.float32):
    """One-time packing of the (static) normalized adjacency and weights.
    compute_dtype controls the MXU operand dtype of the four weight slabs
    (use jnp.bfloat16 on v6e/v7x); accumulation/epilogues stay f32."""
    (w_enc, b_enc, w_gcn, b_gcn, w_q1, b_q1, w_q2, b_q2) = params
    a = jnp.asarray(a_hat, jnp.float32)
    a_hat_pad = jnp.zeros((SUB, SUB), jnp.float32)
    a_hat_pad = a_hat_pad.at[: a.shape[0], : a.shape[1]].set(a)
    slabs = jnp.stack(
        [_pad_weight(w_enc), _pad_weight(w_gcn),
         _pad_weight(w_q1), _pad_weight(w_q2)]).astype(compute_dtype)
    biases = jnp.stack(
        [_pad_bias(b_enc), _pad_bias(b_gcn), _pad_bias(b_q1), _pad_bias(b_q2)])
    return a_hat_pad, slabs, biases


@partial(jax.jit, static_argnums=(4, 5))
def thermogrl_forward(feature, a_hat_pad, slabs, biases, num_nodes, action_dim):
    """feature: (num_nodes, num_features) on device.  Returns (num_nodes, action_dim) f32."""
    n, f = feature.shape
    feat_pad = jnp.pad(feature.astype(jnp.float32), ((0, SUB - n), (0, LANE - f)))

    itemsize = jnp.dtype(slabs.dtype).itemsize
    vmem = pl.BlockSpec(memory_space=pltpu.MemorySpace.VMEM)
    q_pad = pl.pallas_call(
        thermogrl_kernel,
        out_shape=jax.ShapeDtypeStruct((SUB, LANE), jnp.float32),
        in_specs=[vmem, vmem, vmem, vmem],
        out_specs=vmem,
        cost_estimate=pl.CostEstimate(
            flops=2 * (4 * SUB * LANE * LANE + SUB * SUB * LANE),
            transcendentals=0,
            bytes_accessed=(SUB * LANE * 4          # feat
                            + SUB * SUB * 4         # A_hat
                            + 4 * LANE * LANE * itemsize   # weight slabs
                            + 4 * LANE * 4          # biases
                            + SUB * LANE * 4),      # output
        ),
    )(feat_pad, a_hat_pad, slabs, biases)
    # Padded rows/cols never contaminate the real block (padded A_hat cols and
    # padded weight/bias lanes are zero), so the slice is exact.
    return q_pad[:num_nodes, :action_dim]


# ------------------------------- glue code -------------------------------- #
def build_feature_matrix(eplus_obs_vec, zone_index, zone_to_variables, handle_to_index):
    """Encoder.generate_feature_matrix — pure static dict/gather glue (host-side)."""
    rows = []
    for zone_name in zone_index:
        zone_features = []
        for variable_handle in zone_to_variables[zone_name]:
            if variable_handle == 0:
                zone_features.append(0.0)
            else:
                zone_features.append(float(eplus_obs_vec[handle_to_index[variable_handle]]))
        rows.append(zone_features)
    return np.array(rows, dtype=np.float32)


def build_gcn_norm(edge_index, num_nodes):
    """Dense \\hat{A} = D^{-1/2}(A + I)D^{-1/2}, matching PyG GCNConv defaults."""
    A = np.zeros((num_nodes, num_nodes), dtype=np.float32)
    src, dst = edge_index
    for s, d in zip(src, dst):
        A[d, s] = 1.0                                   # message flows src -> dst
    A = A + np.eye(num_nodes, dtype=np.float32)         # self loops
    deg = A.sum(axis=1)
    dinv = 1.0 / np.sqrt(np.maximum(deg, 1e-12))
    return (dinv[:, None] * A * dinv[None, :]).astype(np.float32)


def init_params(key, num_features, encoder_hidden_dim, gcn_hidden_dim,
                q_net_hidden_dim, action_dim):
    ks = jax.random.split(key, 8)

    def lin(kw, kb, fan_in, fan_out):
        w = jax.random.normal(kw, (fan_in, fan_out), jnp.float32) * 0.1
        b = jax.random.normal(kb, (1, fan_out), jnp.float32) * 0.01
        return w, b

    w_enc, b_enc = lin(ks[0], ks[1], num_features, encoder_hidden_dim)
    w_gcn, b_gcn = lin(ks[2], ks[3], encoder_hidden_dim, gcn_hidden_dim)
    w_q1, b_q1 = lin(ks[4], ks[5], gcn_hidden_dim, q_net_hidden_dim)
    w_q2, b_q2 = lin(ks[6], ks[7], q_net_hidden_dim, action_dim)
    return (w_enc, b_enc, w_gcn, b_gcn, w_q1, b_q1, w_q2, b_q2)


def reference_forward(feature, a_hat, params):
    (w_enc, b_enc, w_gcn, b_gcn, w_q1, b_q1, w_q2, b_q2) = params
    h1 = jnp.maximum(feature @ w_enc + b_enc, 0.0)
    h2 = jnp.maximum(a_hat @ (h1 @ w_gcn) + b_gcn, 0.0)
    h3 = jnp.maximum(h2 @ w_q1 + b_q1, 0.0)
    return h3 @ w_q2 + b_q2


# --------------------------------- main ------------------------------------ #
if __name__ == "__main__":
    # Small, deterministic problem setup consistent with the module.
    num_nodes = 8          # zones / graph nodes
    num_features = 4
    encoder_hidden_dim = 32
    gcn_hidden_dim = 32
    q_net_hidden_dim = 32
    action_dim = 8
    obs_len = 16

    # Static zone / handle bookkeeping (deterministic).
    zone_index = [f"zone_{i}" for i in range(num_nodes)]
    handle_to_index = {100 + k: k for k in range(obs_len)}
    zone_to_variables = {}
    for i, zn in enumerate(zone_index):
        handles = []
        for j in range(num_features):
            if (i + j) % 5 == 0:
                handles.append(0)                       # missing handle -> feature 0
            else:
                handles.append(100 + (i * num_features + j) % obs_len)
        zone_to_variables[zn] = handles

    # Ring graph (bidirectional) edge_index, shape (2, E).
    src = list(range(num_nodes)) + [(i + 1) % num_nodes for i in range(num_nodes)]
    dst = [(i + 1) % num_nodes for i in range(num_nodes)] + list(range(num_nodes))
    edge_index = np.array([src, dst], dtype=np.int32)

    # Deterministic inputs / parameters.
    key = jax.random.PRNGKey(0)
    k_obs, k_params = jax.random.split(key)
    eplus_obs_vec = np.asarray(jax.random.normal(k_obs, (obs_len,), jnp.float32))

    feature_np = build_feature_matrix(eplus_obs_vec, zone_index,
                                      zone_to_variables, handle_to_index)
    a_hat_np = build_gcn_norm(edge_index, num_nodes)

    feature = jnp.asarray(feature_np)      # kept on device across calls
    a_hat = jnp.asarray(a_hat_np)
    params = init_params(k_params, num_features, encoder_hidden_dim,
                         gcn_hidden_dim, q_net_hidden_dim, action_dim)
    q_ref = reference_forward(feature, a_hat, params)

    # --- f32 operand path (reference-exact) ---
    a_hat_pad, slabs, biases = pack_model(a_hat, params, compute_dtype=jnp.float32)
    q = thermogrl_forward(feature, a_hat_pad, slabs, biases, num_nodes, action_dim)
    q = jax.block_until_ready(q)
    np.testing.assert_allclose(np.asarray(q), np.asarray(q_ref), rtol=1e-5, atol=1e-5)

    # --- bf16 operand path (v6e/v7x MXU fast path; f32 accumulation/epilogue) ---
    a_hat_pad16, slabs16, biases16 = pack_model(a_hat, params, compute_dtype=jnp.bfloat16)
    q16 = thermogrl_forward(feature, a_hat_pad16, slabs16, biases16, num_nodes, action_dim)
    q16 = jax.block_until_ready(q16)
    np.testing.assert_allclose(np.asarray(q16), np.asarray(q_ref), rtol=3e-2, atol=3e-2)

    print("KERNEL_OK")
</pallas_src>

<mosaic_0001>
module attributes {stable_mosaic.version = 11 : i64} {
  func.func @thermogrl_kernel(%arg0: memref<8x128xf32, #tpu.memory_space<vmem>>, %arg1: memref<8x8xf32, #tpu.memory_space<vmem>>, %arg2: memref<4x128x128xf32, #tpu.memory_space<vmem>>, %arg3: memref<4x128xf32, #tpu.memory_space<vmem>>, %arg4: memref<8x128xf32, #tpu.memory_space<vmem>>) attributes {dimension_semantics = [], scalar_prefetch = 0 : i64, scratch_operands = 0 : i64, tpu.core_type = #tpu.core_type<tc>} {
    %c0 = arith.constant 0 : index
    %c0_0 = arith.constant 0 : index
    %0 = vector.load %arg3[%c0, %c0_0] : memref<4x128xf32, #tpu.memory_space<vmem>>, vector<4x128xf32>
    %c0_1 = arith.constant 0 : index
    %c0_2 = arith.constant 0 : index
    %1 = vector.load %arg0[%c0_1, %c0_2] : memref<8x128xf32, #tpu.memory_space<vmem>>, vector<8x128xf32>
    %c0_3 = arith.constant 0 : index
    %c0_4 = arith.constant 0 : index
    %c0_5 = arith.constant 0 : index
    %2 = vector.load %arg2[%c0_3, %c0_4, %c0_5] : memref<4x128x128xf32, #tpu.memory_space<vmem>>, vector<1x128x128xf32>
    %3 = vector.shape_cast %2 : vector<1x128x128xf32> to vector<128x128xf32>
    %cst = arith.constant dense<0.000000e+00> : vector<8x128xf32>
    %4 = tpu.matmul %1, %3, %cst {dimension_numbers = #tpu.dot_dimension_numbers<[1], [0], [0], [1], [0, 0, 1, 1], [], []>} : vector<8x128xf32>, vector<128x128xf32>, vector<8x128xf32> -> vector<8x128xf32>
    %5 = vector.extract_strided_slice %0 {offsets = [0, 0], sizes = [1, 128], strides = [1, 1]} : vector<4x128xf32> to vector<1x128xf32>
    %6 = vector.broadcast %5 : vector<1x128xf32> to vector<8x128xf32>
    %7 = arith.addf %4, %6 : vector<8x128xf32>
    %cst_6 = arith.constant 0.000000e+00 : f32
    %8 = vector.broadcast %cst_6 : f32 to vector<8x128xf32>
    %9 = arith.maximumf %7, %8 : vector<8x128xf32>
    %c1 = arith.constant 1 : index
    %c0_7 = arith.constant 0 : index
    %c0_8 = arith.constant 0 : index
    %10 = vector.load %arg2[%c1, %c0_7, %c0_8] : memref<4x128x128xf32, #tpu.memory_space<vmem>>, vector<1x128x128xf32>
    %11 = vector.shape_cast %10 : vector<1x128x128xf32> to vector<128x128xf32>
    %cst_9 = arith.constant dense<0.000000e+00> : vector<8x128xf32>
    %12 = tpu.matmul %9, %11, %cst_9 {dimension_numbers = #tpu.dot_dimension_numbers<[1], [0], [0], [1], [0, 0, 1, 1], [], []>} : vector<8x128xf32>, vector<128x128xf32>, vector<8x128xf32> -> vector<8x128xf32>
    %c0_10 = arith.constant 0 : index
    %c0_11 = arith.constant 0 : index
    %13 = vector.load %arg1[%c0_10, %c0_11] : memref<8x8xf32, #tpu.memory_space<vmem>>, vector<8x8xf32>
    %cst_12 = arith.constant dense<0.000000e+00> : vector<8x128xf32>
    %14 = tpu.matmul %13, %12, %cst_12 {dimension_numbers = #tpu.dot_dimension_numbers<[1], [0], [0], [1], [0, 0, 1, 1], [], []>} : vector<8x8xf32>, vector<8x128xf32>, vector<8x128xf32> -> vector<8x128xf32>
    %15 = vector.extract_strided_slice %0 {offsets = [1, 0], sizes = [1, 128], strides = [1, 1]} : vector<4x128xf32> to vector<1x128xf32>
    %16 = vector.broadcast %15 : vector<1x128xf32> to vector<8x128xf32>
    %17 = arith.addf %14, %16 : vector<8x128xf32>
    %cst_13 = arith.constant 0.000000e+00 : f32
    %18 = vector.broadcast %cst_13 : f32 to vector<8x128xf32>
    %19 = arith.maximumf %17, %18 : vector<8x128xf32>
    %c2 = arith.constant 2 : index
    %c0_14 = arith.constant 0 : index
    %c0_15 = arith.constant 0 : index
    %20 = vector.load %arg2[%c2, %c0_14, %c0_15] : memref<4x128x128xf32, #tpu.memory_space<vmem>>, vector<1x128x128xf32>
    %21 = vector.shape_cast %20 : vector<1x128x128xf32> to vector<128x128xf32>
    %cst_16 = arith.constant dense<0.000000e+00> : vector<8x128xf32>
    %22 = tpu.matmul %19, %21, %cst_16 {dimension_numbers = #tpu.dot_dimension_numbers<[1], [0], [0], [1], [0, 0, 1, 1], [], []>} : vector<8x128xf32>, vector<128x128xf32>, vector<8x128xf32> -> vector<8x128xf32>
    %23 = vector.extract_strided_slice %0 {offsets = [2, 0], sizes = [1, 128], strides = [1, 1]} : vector<4x128xf32> to vector<1x128xf32>
    %24 = vector.broadcast %23 : vector<1x128xf32> to vector<8x128xf32>
    %25 = arith.addf %22, %24 : vector<8x128xf32>
    %cst_17 = arith.constant 0.000000e+00 : f32
    %26 = vector.broadcast %cst_17 : f32 to vector<8x128xf32>
    %27 = arith.maximumf %25, %26 : vector<8x128xf32>
    %c3 = arith.constant 3 : index
    %c0_18 = arith.constant 0 : index
    %c0_19 = arith.constant 0 : index
    %28 = vector.load %arg2[%c3, %c0_18, %c0_19] : memref<4x128x128xf32, #tpu.memory_space<vmem>>, vector<1x128x128xf32>
    %29 = vector.shape_cast %28 : vector<1x128x128xf32> to vector<128x128xf32>
    %cst_20 = arith.constant dense<0.000000e+00> : vector<8x128xf32>
    %30 = tpu.matmul %27, %29, %cst_20 {dimension_numbers = #tpu.dot_dimension_numbers<[1], [0], [0], [1], [0, 0, 1, 1], [], []>} : vector<8x128xf32>, vector<128x128xf32>, vector<8x128xf32> -> vector<8x128xf32>
    %31 = vector.extract_strided_slice %0 {offsets = [3, 0], sizes = [1, 128], strides = [1, 1]} : vector<4x128xf32> to vector<1x128xf32>
    %32 = vector.broadcast %31 : vector<1x128xf32> to vector<8x128xf32>
    %33 = arith.addf %30, %32 : vector<8x128xf32>
    %c0_21 = arith.constant 0 : index
    %c0_22 = arith.constant 0 : index
    %34 = vector.load %arg4[%c0_21, %c0_22] : memref<8x128xf32, #tpu.memory_space<vmem>>, vector<8x128xf32>
    tpu.vector_store %arg4[%c0_21, %c0_22], %33 {strides = array<i32>} : memref<8x128xf32, #tpu.memory_space<vmem>>, vector<8x128xf32>,
    return
  }
}

</mosaic_0001>

<llo_original>
// kernel: thermogrl_forward.1
$region0: #{thermogrl_forward.1}
  #allocation0 [shape = 'u32[]', space=smem, size = 0x4, offset = 0x4, fixed_abs, tag = 'smem constant byte address 0x4 - core index']
  #allocation1 [shape = 'u32[144,128]{1,0:T(1,128)}', space=vmem, size = 0x12000, scoped, tag = 'internal scratch']
  %s0 = inlined_call_operand.vmem [shape: f32[8,128], index: 0, kind: input, shape index: {}]
  %s1 = inlined_call_operand.vmem [shape: f32[8,8], index: 1, kind: input, shape index: {}]
  %s2 = inlined_call_operand.hbm [shape: f32[4,128,128], index: 2, kind: input, shape index: {}]
  %s3 = inlined_call_operand.vmem [shape: f32[4,128], index: 3, kind: input, shape index: {}]
  %s4 = inlined_call_operand.hbm [shape: f32[8,128], index: 4, kind: output, shape index: {}]
  %s5 = sld [smem:[#allocation0]]
  $region30: #{thermogrl_forward.1} parent=0
    _
  %s7 = ssub.s32 1, %s5
  %s8 = scalar_select 0, %s7, %s5
  $region1: #{thermogrl_forward.1} parent=0
    #allocation2 [shape = 'u8[262144]{0}', space=vmem, size = 0x40000, scoped, tag = 'input window, operand 2, single buffered']
    #allocation3 [shape = 's32[1]{0}', space=sflag, size = 0x4, scoped, tag = 'scoped memory for thermogrl_forward.1']
    #allocation4 [shape = 's32[1]{0}', space=sflag, size = 0x4, scoped, tag = 'scoped memory for thermogrl_forward.1']
    #allocation5 [shape = 'u8[4096]{0}', space=vmem, size = 0x1000, scoped, tag = 'output window, operand 0, single buffered']
    %9 = vsyncpa [#allocation3], 0
    %10 = vsyncpa [#allocation4], 0
    // Predicated region
    $region2: #{thermogrl_forward.1} parent=1 // pred_check
      _
    $region3: #{thermogrl_forward.1} parent=1 // pred_check_branch
      %12 = sbr.rel (0) target = $region5
    $region4: #{thermogrl_forward.1} parent=1 // pred_region
      _
    $region5: #{thermogrl_forward.1} parent=1 // pred_fallthru
      _
    // Predicated region
    $region6: #{thermogrl_forward.1} parent=1 // pred_check
      _
    $region7: #{thermogrl_forward.1} parent=1 // pred_check_branch
      %14 = sbr.rel (0) target = $region9
    $region8: #{thermogrl_forward.1} parent=1 // pred_region
      _
    $region9: #{thermogrl_forward.1} parent=1 // pred_fallthru
      _
    // Predicated region
    $region10: #{thermogrl_forward.1} parent=1 // pred_check
      _
    $region11: #{thermogrl_forward.1} parent=1 // pred_check_branch
      %16 = sbr.rel (0) target = $region13
    $region12: #{thermogrl_forward.1} parent=1 // pred_region
      %s18 = ssub.s32 8192, 8192
      %19 = vsyncadd [#allocation3], %s18
      %s20 = sshll.u32 [#allocation2], 4
      %s21 = int_to_ptr.vmem [resolvable:$true] %s20
      %26 = dma.hbm_to_vmem [thread:$0]  %s2, 8192, %s21, [#allocation3], 128, 128, 8
    $region13: #{thermogrl_forward.1} parent=1 // pred_fallthru
      _
    // Predicated region
    $region14: #{thermogrl_forward.1} parent=1 // pred_check
      _
    $region15: #{thermogrl_forward.1} parent=1 // pred_check_branch
      %28 = sbr.rel (0) target = $region17
    $region16: #{thermogrl_forward.1} parent=1 // pred_region
      _
    $region17: #{thermogrl_forward.1} parent=1 // pred_fallthru
      _
    // Predicated region
    $region18: #{thermogrl_forward.1} parent=1 // pred_check
      _
    $region19: #{thermogrl_forward.1} parent=1 // pred_check_branch
      %30 = sbr.rel (0) target = $region21
    $region20: #{thermogrl_forward.1} parent=1 // pred_region
      %31 = dma.done [#allocation3], 8192
    $region21: #{thermogrl_forward.1} parent=1 // pred_fallthru
      _
    %v32 = vld [vmem:[%s3] sm:$0xf]
    %v33 = vld [vmem:[%s0] sm:$0xff]
    %v34 = vld [vmem:[#allocation2] sm:$0xff]
    %v35 = vld [vmem:[#allocation2 + $0x8] sm:$0xff]
    %v36 = vld [vmem:[#allocation2 + $0x10] sm:$0xff]
    %v37 = vld [vmem:[#allocation2 + $0x18] sm:$0xff]
    %v38 = vld [vmem:[#allocation2 + $0x20] sm:$0xff]
    %v39 = vld [vmem:[#allocation2 + $0x28] sm:$0xff]
    %v40 = vld [vmem:[#allocation2 + $0x30] sm:$0xff]
    %v41 = vld [vmem:[#allocation2 + $0x38] sm:$0xff]
    %v42 = vld [vmem:[#allocation2 + $0x40] sm:$0xff]
    %v43 = vld [vmem:[#allocation2 + $0x48] sm:$0xff]
    %v44 = vld [vmem:[#allocation2 + $0x50] sm:$0xff]
    %v45 = vld [vmem:[#allocation2 + $0x58] sm:$0xff]
    %v46 = vld [vmem:[#allocation2 + $0x60] sm:$0xff]
    %v47 = vld [vmem:[#allocation2 + $0x68] sm:$0xff]
    %v48 = vld [vmem:[#allocation2 + $0x70] sm:$0xff]
    %v49 = vld [vmem:[#allocation2 + $0x78] sm:$0xff]
    %v50 = vlaneseq
    %v51 = vshrl.u32 %v50, 7
    %v52 = vsub.s32 0, %v51
    %v53 = vrot.slane %v32, %v52
    %54 = vmatprep.subr.mxu0 0.0
    %55 = vmatpush1.msra.mxu0 %v34
    %56 = vmatprep.subr.mxu0 0.0
    %57 = vmatpush1.msra.mxu0 %v35
    %58 = vmatprep.subr.mxu0 0.0
    %59 = vmatpush1.msra.mxu0 %v36
    %60 = vmatprep.subr.mxu0 0.0
    %61 = vmatpush1.msra.mxu0 %v37
    %62 = vmatprep.subr.mxu0 0.0
    %63 = vmatpush1.msra.mxu0 %v38
    %64 = vmatprep.subr.mxu0 0.0
    %65 = vmatpush1.msra.mxu0 %v39
    %66 = vmatprep.subr.mxu0 0.0
    %67 = vmatpush1.msra.mxu0 %v40
    %68 = vmatprep.subr.mxu0 0.0
    %69 = vmatpush1.msra.mxu0 %v41
    %70 = vmatprep.subr.mxu0 0.0
    %71 = vmatpush1.msra.mxu0 %v42
    %72 = vmatprep.subr.mxu0 0.0
    %73 = vmatpush1.msra.mxu0 %v43
    %74 = vmatprep.subr.mxu0 0.0
    %75 = vmatpush1.msra.mxu0 %v44
    %76 = vmatprep.subr.mxu0 0.0
    %77 = vmatpush1.msra.mxu0 %v45
    %78 = vmatprep.subr.mxu0 0.0
    %79 = vmatpush1.msra.mxu0 %v46
    %80 = vmatprep.subr.mxu0 0.0
    %81 = vmatpush1.msra.mxu0 %v47
    %82 = vmatprep.subr.mxu0 0.0
    %83 = vmatpush1.msra.mxu0 %v48
    %84 = vmatprep.subr.mxu0 0.0
    %85 = vmatpush1.msra.mxu0 %v49
    %86 = vmatprep.subr.mxu0 0.0
    %87 = vmatpush1.msra.mxu0 0.0
    %88 = vmatprep.subr.mxu0 0.0
    %89 = vmatpush1.msra.mxu0 0.0
    %90 = vmatprep.subr.mxu0 0.0
    %91 = vmatpush1.msra.mxu0 0.0
    %92 = vmatprep.subr.mxu0 0.0
    %93 = vmatpush1.msra.mxu0 0.0
    %94 = vmatprep.subr.mxu0 0.0
    %95 = vmatpush1.msra.mxu0 0.0
    %96 = vmatprep.subr.mxu0 0.0
    %97 = vmatpush1.msra.mxu0 0.0
    %98 = vmatprep.subr.mxu0 0.0
    %99 = vmatpush1.msra.mxu0 0.0
    %100 = vmatprep.subr.mxu0 0.0
    %101 = vmatpush1.msra.mxu0 0.0
    %102 = vmatprep.subr.mxu0 0.0
    %103 = vmatpush1.msra.mxu0 0.0
    %104 = vmatprep.subr.mxu0 0.0
    %105 = vmatpush1.msra.mxu0 0.0
    %106 = vmatprep.subr.mxu0 0.0
    %107 = vmatpush1.msra.mxu0 0.0
    %108 = vmatprep.subr.mxu0 0.0
    %109 = vmatpush1.msra.mxu0 0.0
    %110 = vmatprep.subr.mxu0 0.0
    %111 = vmatpush1.msra.mxu0 0.0
    %112 = vmatprep.subr.mxu0 0.0
    %113 = vmatpush1.msra.mxu0 0.0
    %114 = vmatprep.subr.mxu0 0.0
    %115 = vmatpush1.msra.mxu0 0.0
    %116 = vmatprep.subr.mxu0 0.0
    %117 = vmatpush1.msra.mxu0 0.0
    %118 = vmatprep.mubr.f32.mxu0 0.0
    %119 = vmatmul.mubr.f32.gmra.mrb[0].mxu0 %v33
    %v120 = vpop.f32.mrb[0].mxu0
    %v121 = vadd.f32 %v53, %v120
    %v122 = vpop.f32.mrb[0].mxu0
    %123 = vdwg.mxu0
    %v124 = vmax.f32 %v121, 0.0
    %s125 = scalar_lea.vmem [#allocation2], 128
    %v126 = vld [vmem:[%s125] sm:$0xff]
    %v127 = vld [vmem:[%s125 + $0x8] sm:$0xff]
    %v128 = vld [vmem:[%s125 + $0x10] sm:$0xff]
    %v129 = vld [vmem:[%s125 + $0x18] sm:$0xff]
    %v130 = vld [vmem:[%s125 + $0x20] sm:$0xff]
    %v131 = vld [vmem:[%s125 + $0x28] sm:$0xff]
    %v132 = vld [vmem:[%s125 + $0x30] sm:$0xff]
    %v133 = vld [vmem:[%s125 + $0x38] sm:$0xff]
    %v134 = vld [vmem:[%s125 + $0x40] sm:$0xff]
    %v135 = vld [vmem:[%s125 + $0x48] sm:$0xff]
    %v136 = vld [vmem:[%s125 + $0x50] sm:$0xff]
    %v137 = vld [vmem:[%s125 + $0x58] sm:$0xff]
    %v138 = vld [vmem:[%s125 + $0x60] sm:$0xff]
    %v139 = vld [vmem:[%s125 + $0x68] sm:$0xff]
    %v140 = vld [vmem:[%s125 + $0x70] sm:$0xff]
    %v141 = vld [vmem:[%s125 + $0x78] sm:$0xff]
    %142 = vmatprep.subr.mxu0 0.0
    %143 = vmatpush1.msra.mxu0 %v126
    %144 = vmatprep.subr.mxu0 0.0
    %145 = vmatpush1.msra.mxu0 %v127
    %146 = vmatprep.subr.mxu0 0.0
    %147 = vmatpush1.msra.mxu0 %v128
    %148 = vmatprep.subr.mxu0 0.0
    %149 = vmatpush1.msra.mxu0 %v129
    %150 = vmatprep.subr.mxu0 0.0
    %151 = vmatpush1.msra.mxu0 %v130
    %152 = vmatprep.subr.mxu0 0.0
    %153 = vmatpush1.msra.mxu0 %v131
    %154 = vmatprep.subr.mxu0 0.0
    %155 = vmatpush1.msra.mxu0 %v132
    %156 = vmatprep.subr.mxu0 0.0
    %157 = vmatpush1.msra.mxu0 %v133
    %158 = vmatprep.subr.mxu0 0.0
    %159 = vmatpush1.msra.mxu0 %v134
    %160 = vmatprep.subr.mxu0 0.0
    %161 = vmatpush1.msra.mxu0 %v135
    %162 = vmatprep.subr.mxu0 0.0
    %163 = vmatpush1.msra.mxu0 %v136
    %164 = vmatprep.subr.mxu0 0.0
    %165 = vmatpush1.msra.mxu0 %v137
    %166 = vmatprep.subr.mxu0 0.0
    %167 = vmatpush1.msra.mxu0 %v138
    %168 = vmatprep.subr.mxu0 0.0
    %169 = vmatpush1.msra.mxu0 %v139
    %170 = vmatprep.subr.mxu0 0.0
    %171 = vmatpush1.msra.mxu0 %v140
    %172 = vmatprep.subr.mxu0 0.0
    %173 = vmatpush1.msra.mxu0 %v141
    %174 = vmatprep.subr.mxu0 0.0
    %175 = vmatpush1.msra.mxu0 0.0
    %176 = vmatprep.subr.mxu0 0.0
    %177 = vmatpush1.msra.mxu0 0.0
    %178 = vmatprep.subr.mxu0 0.0
    %179 = vmatpush1.msra.mxu0 0.0
    %180 = vmatprep.subr.mxu0 0.0
    %181 = vmatpush1.msra.mxu0 0.0
    %182 = vmatprep.subr.mxu0 0.0
    %183 = vmatpush1.msra.mxu0 0.0
    %184 = vmatprep.subr.mxu0 0.0
    %185 = vmatpush1.msra.mxu0 0.0
    %186 = vmatprep.subr.mxu0 0.0
    %187 = vmatpush1.msra.mxu0 0.0
    %188 = vmatprep.subr.mxu0 0.0
    %189 = vmatpush1.msra.mxu0 0.0
    %190 = vmatprep.subr.mxu0 0.0
    %191 = vmatpush1.msra.mxu0 0.0
    %192 = vmatprep.subr.mxu0 0.0
    %193 = vmatpush1.msra.mxu0 0.0
    %194 = vmatprep.subr.mxu0 0.0
    %195 = vmatpush1.msra.mxu0 0.0
    %196 = vmatprep.subr.mxu0 0.0
    %197 = vmatpush1.msra.mxu0 0.0
    %198 = vmatprep.subr.mxu0 0.0
    %199 = vmatpush1.msra.mxu0 0.0
    %200 = vmatprep.subr.mxu0 0.0
    %201 = vmatpush1.msra.mxu0 0.0
    %202 = vmatprep.subr.mxu0 0.0
    %203 = vmatpush1.msra.mxu0 0.0
    %204 = vmatprep.subr.mxu0 0.0
    %205 = vmatpush1.msra.mxu0 0.0
    %206 = vmatprep.mubr.f32.mxu0 0.0
    %207 = vmatmul.mubr.f32.gmra.mrb[0].mxu0 %v124
    %v208 = vpop.f32.mrb[0].mxu0
    %v209 = vadd.f32 0.0, %v208
    %v210 = vpop.f32.mrb[0].mxu0
    %211 = vdwg.mxu0
    %v212 = vld [vmem:[%s1] sm:$0xff]
    %v213 = vlaneseq
    %v214 = vshrl.u32 %v213, 7
    %v215 = vsub.s32 1, %v214
    %v216 = vrot.slane %v32, %v215
    %vm217 = vcmask 64512
    %v219 = vsel %vm217, %v212, 0
    %221 = vmatprep.subr.mxu0 0.0
    %222 = vmatpush1.msra.mxu0 %v209
    %223 = vmatprep.subr.mxu0 0.0
    %224 = vmatpush1.msra.mxu0 0.0
    %225 = vmatprep.subr.mxu0 0.0
    %226 = vmatpush1.msra.mxu0 0.0
    %227 = vmatprep.subr.mxu0 0.0
    %228 = vmatpush1.msra.mxu0 0.0
    %229 = vmatprep.subr.mxu0 0.0
    %230 = vmatpush1.msra.mxu0 0.0
    %231 = vmatprep.subr.mxu0 0.0
    %232 = vmatpush1.msra.mxu0 0.0
    %233 = vmatprep.subr.mxu0 0.0
    %234 = vmatpush1.msra.mxu0 0.0
    %235 = vmatprep.subr.mxu0 0.0
    %236 = vmatpush1.msra.mxu0 0.0
    %237 = vmatprep.subr.mxu0 0.0
    %238 = vmatpush1.msra.mxu0 0.0
    %239 = vmatprep.subr.mxu0 0.0
    %240 = vmatpush1.msra.mxu0 0.0
    %241 = vmatprep.subr.mxu0 0.0
    %242 = vmatpush1.msra.mxu0 0.0
    %243 = vmatprep.subr.mxu0 0.0
    %244 = vmatpush1.msra.mxu0 0.0
    %245 = vmatprep.subr.mxu0 0.0
    %246 = vmatpush1.msra.mxu0 0.0
    %247 = vmatprep.subr.mxu0 0.0
    %248 = vmatpush1.msra.mxu0 0.0
    %249 = vmatprep.subr.mxu0 0.0
    %250 = vmatpush1.msra.mxu0 0.0
    %251 = vmatprep.subr.mxu0 0.0
    %252 = vmatpush1.msra.mxu0 0.0
    %253 = vmatprep.subr.mxu0 0.0
    %254 = vmatpush1.msra.mxu0 0.0
    %255 = vmatprep.subr.mxu0 0.0
    %256 = vmatpush1.msra.mxu0 0.0
    %257 = vmatprep.subr.mxu0 0.0
    %258 = vmatpush1.msra.mxu0 0.0
    %259 = vmatprep.subr.mxu0 0.0
    %260 = vmatpush1.msra.mxu0 0.0
    %261 = vmatprep.subr.mxu0 0.0
    %262 = vmatpush1.msra.mxu0 0.0
    %263 = vmatprep.subr.mxu0 0.0
    %264 = vmatpush1.msra.mxu0 0.0
    %265 = vmatprep.subr.mxu0 0.0
    %266 = vmatpush1.msra.mxu0 0.0
    %267 = vmatprep.subr.mxu0 0.0
    %268 = vmatpush1.msra.mxu0 0.0
    %269 = vmatprep.subr.mxu0 0.0
    %270 = vmatpush1.msra.mxu0 0.0
    %271 = vmatprep.subr.mxu0 0.0
    %272 = vmatpush1.msra.mxu0 0.0
    %273 = vmatprep.subr.mxu0 0.0
    %274 = vmatpush1.msra.mxu0 0.0
    %275 = vmatprep.subr.mxu0 0.0
    %276 = vmatpush1.msra.mxu0 0.0
    %277 = vmatprep.subr.mxu0 0.0
    %278 = vmatpush1.msra.mxu0 0.0
    %279 = vmatprep.subr.mxu0 0.0
    %280 = vmatpush1.msra.mxu0 0.0
    %281 = vmatprep.subr.mxu0 0.0
    %282 = vmatpush1.msra.mxu0 0.0
    %283 = vmatprep.subr.mxu0 0.0
    %284 = vmatpush1.msra.mxu0 0.0
    %285 = vmatprep.mubr.f32.mxu0 0.0
    %286 = vmatmul.mubr.f32.gmra.mrb[0].mxu0 %v219
    %v287 = vpop.f32.mrb[0].mxu0
    %v288 = vadd.f32 %v216, %v287
    %v289 = vpop.f32.mrb[0].mxu0
    %290 = vdwg.mxu0
    %v291 = vmax.f32 %v288, 0.0
    %s292 = scalar_lea.vmem [#allocation2], 256
    %v293 = vld [vmem:[%s292] sm:$0xff]
    %v294 = vld [vmem:[%s292 + $0x8] sm:$0xff]
    %v295 = vld [vmem:[%s292 + $0x10] sm:$0xff]
    %v296 = vld [vmem:[%s292 + $0x18] sm:$0xff]
    %v297 = vld [vmem:[%s292 + $0x20] sm:$0xff]
    %v298 = vld [vmem:[%s292 + $0x28] sm:$0xff]
    %v299 = vld [vmem:[%s292 + $0x30] sm:$0xff]
    %v300 = vld [vmem:[%s292 + $0x38] sm:$0xff]
    %v301 = vld [vmem:[%s292 + $0x40] sm:$0xff]
    %v302 = vld [vmem:[%s292 + $0x48] sm:$0xff]
    %v303 = vld [vmem:[%s292 + $0x50] sm:$0xff]
    %v304 = vld [vmem:[%s292 + $0x58] sm:$0xff]
    %v305 = vld [vmem:[%s292 + $0x60] sm:$0xff]
    %v306 = vld [vmem:[%s292 + $0x68] sm:$0xff]
    %v307 = vld [vmem:[%s292 + $0x70] sm:$0xff]
    %v308 = vld [vmem:[%s292 + $0x78] sm:$0xff]
    %v309 = vlaneseq
    %v310 = vshrl.u32 %v309, 7
    %v311 = vsub.s32 2, %v310
    %v312 = vrot.slane %v32, %v311
    %313 = vmatprep.subr.mxu0 0.0
    %314 = vmatpush1.msra.mxu0 %v293
    %315 = vmatprep.subr.mxu0 0.0
    %316 = vmatpush1.msra.mxu0 %v294
    %317 = vmatprep.subr.mxu0 0.0
    %318 = vmatpush1.msra.mxu0 %v295
    %319 = vmatprep.subr.mxu0 0.0
    %320 = vmatpush1.msra.mxu0 %v296
    %321 = vmatprep.subr.mxu0 0.0
    %322 = vmatpush1.msra.mxu0 %v297
    %323 = vmatprep.subr.mxu0 0.0
    %324 = vmatpush1.msra.mxu0 %v298
    %325 = vmatprep.subr.mxu0 0.0
    %326 = vmatpush1.msra.mxu0 %v299
    %327 = vmatprep.subr.mxu0 0.0
    %328 = vmatpush1.msra.mxu0 %v300
    %329 = vmatprep.subr.mxu0 0.0
    %330 = vmatpush1.msra.mxu0 %v301
    %331 = vmatprep.subr.mxu0 0.0
    %332 = vmatpush1.msra.mxu0 %v302
    %333 = vmatprep.subr.mxu0 0.0
    %334 = vmatpush1.msra.mxu0 %v303
    %335 = vmatprep.subr.mxu0 0.0
    %336 = vmatpush1.msra.mxu0 %v304
    %337 = vmatprep.subr.mxu0 0.0
    %338 = vmatpush1.msra.mxu0 %v305
    %339 = vmatprep.subr.mxu0 0.0
    %340 = vmatpush1.msra.mxu0 %v306
    %341 = vmatprep.subr.mxu0 0.0
    %342 = vmatpush1.msra.mxu0 %v307
    %343 = vmatprep.subr.mxu0 0.0
    %344 = vmatpush1.msra.mxu0 %v308
    %345 = vmatprep.subr.mxu0 0.0
    %346 = vmatpush1.msra.mxu0 0.0
    %347 = vmatprep.subr.mxu0 0.0
    %348 = vmatpush1.msra.mxu0 0.0
    %349 = vmatprep.subr.mxu0 0.0
    %350 = vmatpush1.msra.mxu0 0.0
    %351 = vmatprep.subr.mxu0 0.0
    %352 = vmatpush1.msra.mxu0 0.0
    %353 = vmatprep.subr.mxu0 0.0
    %354 = vmatpush1.msra.mxu0 0.0
    %355 = vmatprep.subr.mxu0 0.0
    %356 = vmatpush1.msra.mxu0 0.0
    %357 = vmatprep.subr.mxu0 0.0
    %358 = vmatpush1.msra.mxu0 0.0
    %359 = vmatprep.subr.mxu0 0.0
    %360 = vmatpush1.msra.mxu0 0.0
    %361 = vmatprep.subr.mxu0 0.0
    %362 = vmatpush1.msra.mxu0 0.0
    %363 = vmatprep.subr.mxu0 0.0
    %364 = vmatpush1.msra.mxu0 0.0
    %365 = vmatprep.subr.mxu0 0.0
    %366 = vmatpush1.msra.mxu0 0.0
    %367 = vmatprep.subr.mxu0 0.0
    %368 = vmatpush1.msra.mxu0 0.0
    %369 = vmatprep.subr.mxu0 0.0
    %370 = vmatpush1.msra.mxu0 0.0
    %371 = vmatprep.subr.mxu0 0.0
    %372 = vmatpush1.msra.mxu0 0.0
    %373 = vmatprep.subr.mxu0 0.0
    %374 = vmatpush1.msra.mxu0 0.0
    %375 = vmatprep.subr.mxu0 0.0
    %376 = vmatpush1.msra.mxu0 0.0
    %377 = vmatprep.mubr.f32.mxu0 0.0
    %378 = vmatmul.mubr.f32.gmra.mrb[0].mxu0 %v291
    %v379 = vpop.f32.mrb[0].mxu0
    %v380 = vadd.f32 %v312, %v379
    %v381 = vpop.f32.mrb[0].mxu0
    %382 = vdwg.mxu0
    %v383 = vmax.f32 %v380, 0.0
    %s384 = scalar_lea.vmem [#allocation2], 384
    %v385 = vld [vmem:[%s384] sm:$0xff]
    %v386 = vld [vmem:[%s384 + $0x8] sm:$0xff]
    %v387 = vld [vmem:[%s384 + $0x10] sm:$0xff]
    %v388 = vld [vmem:[%s384 + $0x18] sm:$0xff]
    %v389 = vld [vmem:[%s384 + $0x20] sm:$0xff]
    %v390 = vld [vmem:[%s384 + $0x28] sm:$0xff]
    %v391 = vld [vmem:[%s384 + $0x30] sm:$0xff]
    %v392 = vld [vmem:[%s384 + $0x38] sm:$0xff]
    %v393 = vld [vmem:[%s384 + $0x40] sm:$0xff]
    %v394 = vld [vmem:[%s384 + $0x48] sm:$0xff]
    %v395 = vld [vmem:[%s384 + $0x50] sm:$0xff]
    %v396 = vld [vmem:[%s384 + $0x58] sm:$0xff]
    %v397 = vld [vmem:[%s384 + $0x60] sm:$0xff]
    %v398 = vld [vmem:[%s384 + $0x68] sm:$0xff]
    %v399 = vld [vmem:[%s384 + $0x70] sm:$0xff]
    %v400 = vld [vmem:[%s384 + $0x78] sm:$0xff]
    %v401 = vlaneseq
    %v402 = vshrl.u32 %v401, 7
    %v403 = vsub.s32 3, %v402
    %v404 = vrot.slane %v32, %v403
    %405 = vmatprep.subr.mxu0 0.0
    %406 = vmatpush1.msra.mxu0 %v385
    %407 = vmatprep.subr.mxu0 0.0
    %408 = vmatpush1.msra.mxu0 %v386
    %409 = vmatprep.subr.mxu0 0.0
    %410 = vmatpush1.msra.mxu0 %v387
    %411 = vmatprep.subr.mxu0 0.0
    %412 = vmatpush1.msra.mxu0 %v388
    %413 = vmatprep.subr.mxu0 0.0
    %414 = vmatpush1.msra.mxu0 %v389
    %415 = vmatprep.subr.mxu0 0.0
    %416 = vmatpush1.msra.mxu0 %v390
    %417 = vmatprep.subr.mxu0 0.0
    %418 = vmatpush1.msra.mxu0 %v391
    %419 = vmatprep.subr.mxu0 0.0
    %420 = vmatpush1.msra.mxu0 %v392
    %421 = vmatprep.subr.mxu0 0.0
    %422 = vmatpush1.msra.mxu0 %v393
    %423 = vmatprep.subr.mxu0 0.0
    %424 = vmatpush1.msra.mxu0 %v394
    %425 = vmatprep.subr.mxu0 0.0
    %426 = vmatpush1.msra.mxu0 %v395
    %427 = vmatprep.subr.mxu0 0.0
    %428 = vmatpush1.msra.mxu0 %v396
    %429 = vmatprep.subr.mxu0 0.0
    %430 = vmatpush1.msra.mxu0 %v397
    %431 = vmatprep.subr.mxu0 0.0
    %432 = vmatpush1.msra.mxu0 %v398
    %433 = vmatprep.subr.mxu0 0.0
    %434 = vmatpush1.msra.mxu0 %v399
    %435 = vmatprep.subr.mxu0 0.0
    %436 = vmatpush1.msra.mxu0 %v400
    %437 = vmatprep.subr.mxu0 0.0
    %438 = vmatpush1.msra.mxu0 0.0
    %439 = vmatprep.subr.mxu0 0.0
    %440 = vmatpush1.msra.mxu0 0.0
    %441 = vmatprep.subr.mxu0 0.0
    %442 = vmatpush1.msra.mxu0 0.0
    %443 = vmatprep.subr.mxu0 0.0
    %444 = vmatpush1.msra.mxu0 0.0
    %445 = vmatprep.subr.mxu0 0.0
    %446 = vmatpush1.msra.mxu0 0.0
    %447 = vmatprep.subr.mxu0 0.0
    %448 = vmatpush1.msra.mxu0 0.0
    %449 = vmatprep.subr.mxu0 0.0
    %450 = vmatpush1.msra.mxu0 0.0
    %451 = vmatprep.subr.mxu0 0.0
    %452 = vmatpush1.msra.mxu0 0.0
    %453 = vmatprep.subr.mxu0 0.0
    %454 = vmatpush1.msra.mxu0 0.0
    %455 = vmatprep.subr.mxu0 0.0
    %456 = vmatpush1.msra.mxu0 0.0
    %457 = vmatprep.subr.mxu0 0.0
    %458 = vmatpush1.msra.mxu0 0.0
    %459 = vmatprep.subr.mxu0 0.0
    %460 = vmatpush1.msra.mxu0 0.0
    %461 = vmatprep.subr.mxu0 0.0
    %462 = vmatpush1.msra.mxu0 0.0
    %463 = vmatprep.subr.mxu0 0.0
    %464 = vmatpush1.msra.mxu0 0.0
    %465 = vmatprep.subr.mxu0 0.0
    %466 = vmatpush1.msra.mxu0 0.0
    %467 = vmatprep.subr.mxu0 0.0
    %468 = vmatpush1.msra.mxu0 0.0
    %469 = vmatprep.mubr.f32.mxu0 0.0
    %470 = vmatmul.mubr.f32.gmra.mrb[0].mxu0 %v383
    %v471 = vpop.f32.mrb[0].mxu0
    %v472 = vadd.f32 %v404, %v471
    %v473 = vpop.f32.mrb[0].mxu0
    %474 = vdwg.mxu0
    %475 = vst [vmem:[#allocation5] sm:$0xff] %v472
    // Predicated region
    $region22: #{thermogrl_forward.1} parent=1 // pred_check
      _
    $region23: #{thermogrl_forward.1} parent=1 // pred_check_branch
      %477 = sbr.rel (0) target = $region25
    $region24: #{thermogrl_forward.1} parent=1 // pred_region
      %s479 = ssub.s32 128, 128
      %480 = vsyncadd [#allocation4], %s479
      %s482 = sshll.u32 [#allocation5], 4
      %s483 = int_to_ptr.vmem [resolvable:$true] %s482
      %485 = dma.vmem_to_hbm [thread:$0]  %s483, 128, %s4, [#allocation4]
    $region25: #{thermogrl_forward.1} parent=1 // pred_fallthru
      _
    // Predicated region
    $region26: #{thermogrl_forward.1} parent=1 // pred_check
      _
    $region27: #{thermogrl_forward.1} parent=1 // pred_check_branch
      %487 = sbr.rel (0) target = $region29
    $region28: #{thermogrl_forward.1} parent=1 // pred_region
      %488 = dma.done [#allocation4], 128
    $region29: #{thermogrl_forward.1} parent=1 // pred_fallthru
      _
    %489 = vsyncpa [#allocation3], 1
    %490 = vsyncpa [#allocation4], 1

</llo_original>
